<compile_context>
chip_gen: v7x
topology: tpu7x:2x2x1
jax: 0.10.0
libtpu: 0.0.40
codegen_flags: <defaults>
</compile_context>

<pallas_src>
import math

import jax
import jax.numpy as jnp
from jax.experimental import pallas as pl
from jax.experimental.pallas import tpu as pltpu


# ------------------------------ small helpers -------------------------------

def _round_up(n, m):
    return ((n + m - 1) // m) * m


def _pad_axis(a, axis, target):
    pad = target - a.shape[axis]
    if pad <= 0:
        return a
    widths = [(0, 0)] * a.ndim
    widths[axis] = (0, pad)
    return jnp.pad(a, widths)


def _device_kind():
    try:
        return jax.devices()[0].device_kind.lower()
    except Exception:
        return ""


def _auto_mxu_dtype():
    # bf16 MXU inputs only where the VPU also has bf16 (v6e / v7x). On v5e the
    # per-dot casts land on the already-binding VALU slot and x is not the
    # dominant HBM stream, so stay in f32 there.
    kind = _device_kind()
    if "v6" in kind or "v7" in kind:
        return jnp.bfloat16
    return jnp.float32


def _vmem_cap_bytes():
    # Generation-aware ceiling: v7x has only 64 MiB physical VMEM per core.
    kind = _device_kind()
    if "v7" in kind:
        return 30 << 20
    return 48 << 20


def _pick_block_b(B, cap, align):
    """Batch tile: `align`-aligned, <= cap, and >= 2 grid steps whenever
    B > one aligned tile (so the 'parallel' batch axis shards across v7x's
    two TensorCores). The wrapper zero-pads B up to a multiple of the tile."""
    if B <= align:
        return align
    half = -(-B // 2)                      # ceil(B / 2) -> at least 2 steps
    return min(cap, _round_up(half, align))


# ----------------------------- in-kernel math --------------------------------

def _gelu_tanh(x):
    # tanh-approx GELU: tanh goes to the EUP (otherwise idle here), leaving
    # only a handful of VALU mul/adds. |err| vs exact erf-GELU ~ a few 1e-4.
    c = math.sqrt(2.0 / math.pi)
    return 0.5 * x * (1.0 + jnp.tanh(c * (x + 0.044715 * (x * x * x))))


# --------------------------------- kernel ------------------------------------

def se_head_kernel(x_ref,
                   w1_ref, b1_ref,      # fc1:  (D, Dr_pad), (1, Dr_pad)
                   w2_ref, b2_ref,      # fc2:  (Dr_pad, D), (1, D)
                   wd1_ref, bd1_ref,    # deep[0]: (D, H1), (1, H1)
                   wd2_ref, bd2_ref,    # deep[3]: (H1, H2), (1, H2)
                   wc_ref, bc_ref,      # classifier: (H2, C_pad), (1, C_pad)
                   out_ref):            # (block_b, C_pad)
    cdt = w1_ref.dtype                  # MXU input dtype (f32 or bf16)
    x = x_ref[...]
    xf = x.astype(jnp.float32)

    # ---- SE gate: s = relu(fc1(x)); g = sigmoid(fc2(s)); h = x * g ----
    s = jnp.dot(x, w1_ref[...], preferred_element_type=jnp.float32)
    s = jnp.maximum(s + b1_ref[...], 0.0)
    g = jnp.dot(s.astype(cdt), w2_ref[...], preferred_element_type=jnp.float32)
    g = jax.nn.sigmoid(g + b2_ref[...])
    h = xf * g

    # ---- deep MLP: Linear -> GELU -> (Dropout=id) -> Linear -> GELU -> (Dropout=id) ----
    h = jnp.dot(h.astype(cdt), wd1_ref[...],
                preferred_element_type=jnp.float32) + bd1_ref[...]
    h = _gelu_tanh(h)
    h = jnp.dot(h.astype(cdt), wd2_ref[...],
                preferred_element_type=jnp.float32) + bd2_ref[...]
    h = _gelu_tanh(h)

    # ---- classifier (padded only to 8 cols -> tiny writeback stream) ----
    out = jnp.dot(h.astype(cdt), wc_ref[...],
                  preferred_element_type=jnp.float32) + bc_ref[...]
    out_ref[...] = out.astype(out_ref.dtype)


# -------------------------------- wrapper -------------------------------------

def se_head_forward(x, params, *, block_b=None, block_b_cap=4096,
                    mxu_dtype=None, out_dtype=jnp.float32):
    """x: (B, D). params: dict of (in,out)-transposed weights + (1,out) biases."""
    B, D = x.shape
    Dr = params["w1"].shape[1]
    H1 = params["wd1"].shape[1]
    H2 = params["wd2"].shape[1]
    C = params["wc"].shape[1]

    cdt = jnp.dtype(_auto_mxu_dtype() if mxu_dtype is None else mxu_dtype)
    align = 16 if cdt == jnp.bfloat16 else 8     # bf16 sublane pack

    Dr_pad = max(8, _round_up(Dr, 8))            # sublane-align SE bottleneck
    C_pad = max(8, _round_up(C, 8))              # small pad; block == full dim is legal

    if block_b is None:
        block_b = _pick_block_b(B, block_b_cap, align)
    block_b = max(align, _round_up(block_b, align))
    B_pad = _round_up(B, block_b)
    grid = (B_pad // block_b,)

    # Zero-padding is exact: padded fc1 cols give relu(0)=0, padded fc2 rows
    # are zero, padded classifier cols / batch rows are sliced away below.
    w1 = _pad_axis(params["w1"], 1, Dr_pad).astype(cdt)
    b1 = _pad_axis(params["b1"], 1, Dr_pad).astype(jnp.float32)
    w2 = _pad_axis(params["w2"], 0, Dr_pad).astype(cdt)
    b2 = params["b2"].astype(jnp.float32)
    wd1 = params["wd1"].astype(cdt)
    bd1 = params["bd1"].astype(jnp.float32)
    wd2 = params["wd2"].astype(cdt)
    bd2 = params["bd2"].astype(jnp.float32)
    wc = _pad_axis(params["wc"], 1, C_pad).astype(cdt)
    bc = _pad_axis(params["bc"], 1, C_pad).astype(jnp.float32)
    xc = _pad_axis(x, 0, B_pad).astype(cdt)

    weights = (w1, b1, w2, b2, wd1, bd1, wd2, bd2, wc, bc)

    def full(arr):
        # whole-array (untiled) block, resident across the batch grid axis
        return pl.BlockSpec(arr.shape, lambda i: (0,) * arr.ndim)

    in_specs = ([pl.BlockSpec((block_b, D), lambda i: (i, 0))]
                + [full(a) for a in weights])
    out_spec = pl.BlockSpec((block_b, C_pad), lambda i: (i, 0))

    out_itemsize = jnp.dtype(out_dtype).itemsize
    weight_bytes = sum(int(a.size) * a.dtype.itemsize for a in weights)

    # Advisory cost estimate (whole call) for XLA scheduling.
    flops = 2 * B_pad * (D * Dr_pad + Dr_pad * D + D * H1 + H1 * H2 + H2 * C_pad)
    transcendentals = B_pad * (D + H1 + H2)      # sigmoid + 2x tanh-GELU
    bytes_accessed = (int(xc.size) * cdt.itemsize + weight_bytes
                      + B_pad * C_pad * out_itemsize)

    # VMEM budget: resident weights + double-buffered x/out tiles + f32
    # intermediates, with headroom; capped per generation.
    io_bytes = 2 * block_b * (D * cdt.itemsize + C_pad * out_itemsize)
    act_bytes = 2 * block_b * (Dr_pad + 2 * D + H1 + H2 + C_pad) * 4
    vmem_limit = weight_bytes + io_bytes + act_bytes + (4 << 20)
    vmem_limit = int(min(max(vmem_limit, 16 << 20), _vmem_cap_bytes()))

    out_padded = pl.pallas_call(
        se_head_kernel,
        out_shape=jax.ShapeDtypeStruct((B_pad, C_pad), out_dtype),
        grid_spec=pltpu.PrefetchScalarGridSpec(
            num_scalar_prefetch=0,
            grid=grid,
            in_specs=in_specs,
            out_specs=out_spec,
        ),
        compiler_params=pltpu.CompilerParams(
            dimension_semantics=("parallel",),
            vmem_limit_bytes=vmem_limit),
        cost_estimate=pl.CostEstimate(flops=flops,
                                      transcendentals=transcendentals,
                                      bytes_accessed=bytes_accessed),
    )(xc, *weights)

    return out_padded[:B, :C]


# ------------------------ deterministic parameter init ------------------------

def init_params(key, input_dim, reduction=8, hidden_dims=(128, 64), num_classes=7):
    """Synthetic deterministic init. PyTorch Linear weight is (out, in); we store
    the transpose (in, out) so the kernel computes x @ W + b directly."""
    dims = [
        ("w1", "b1", input_dim, input_dim // reduction),
        ("w2", "b2", input_dim // reduction, input_dim),
        ("wd1", "bd1", input_dim, hidden_dims[0]),
        ("wd2", "bd2", hidden_dims[0], hidden_dims[1]),
        ("wc", "bc", hidden_dims[1], num_classes),
    ]
    params = {}
    for wname, bname, fan_in, fan_out in dims:
        key, kw, kb = jax.random.split(key, 3)
        bound = 1.0 / math.sqrt(fan_in)
        w = jax.random.uniform(kw, (fan_out, fan_in), jnp.float32, -bound, bound)
        b = jax.random.uniform(kb, (fan_out,), jnp.float32, -bound, bound)
        params[wname] = jnp.transpose(w)          # (in, out)
        params[bname] = b.reshape(1, fan_out)     # (1, out)
    return params


# ------------------------------ JAX reference ----------------------------------

def se_head_reference(x, params):
    s = jax.nn.relu(x @ params["w1"] + params["b1"])
    g = jax.nn.sigmoid(s @ params["w2"] + params["b2"])
    h = x * g
    h = jax.nn.gelu(h @ params["wd1"] + params["bd1"], approximate=False)
    h = jax.nn.gelu(h @ params["wd2"] + params["bd2"], approximate=False)
    return h @ params["wc"] + params["bc"]


if __name__ == "__main__":
    batch = 8
    input_dim = 32
    reduction = 8
    hidden_dims = (128, 64)
    num_classes = 7

    key = jax.random.PRNGKey(0)
    key, kx, kx2, kx3 = jax.random.split(key, 4)
    params = init_params(key, input_dim, reduction, hidden_dims, num_classes)

    # 1) small-batch f32 path (single aligned tile). Tolerance 1e-2 covers the
    #    tanh-approx GELU vs the exact-erf reference (error is a few 1e-4).
    x = jax.random.normal(kx, (batch, input_dim), jnp.float32)
    out = jax.block_until_ready(
        se_head_forward(x, params, mxu_dtype=jnp.float32))
    ref = se_head_reference(x, params)
    assert out.shape == (batch, num_classes), out.shape
    assert jnp.allclose(out, ref, atol=1e-2, rtol=1e-2), (
        f"f32 max abs err = {jnp.max(jnp.abs(out - ref))}")

    # 2) bf16 MXU path with a multi-step pipelined grid (B=64 -> 2 steps).
    xb = jax.random.normal(kx2, (64, input_dim), jnp.float32)
    out_bf = jax.block_until_ready(
        se_head_forward(xb, params, mxu_dtype=jnp.bfloat16))
    ref_b = se_head_reference(xb, params)
    assert out_bf.shape == (64, num_classes), out_bf.shape
    assert jnp.allclose(out_bf, ref_b, atol=5e-2, rtol=5e-2), (
        f"bf16 max abs err = {jnp.max(jnp.abs(out_bf - ref_b))}")

    # 3) awkward batch (50): exercises batch zero-padding + slicing and the
    #    generation-aware auto mxu_dtype default.
    xo = jax.random.normal(kx3, (50, input_dim), jnp.float32)
    out_o = jax.block_until_ready(se_head_forward(xo, params))
    ref_o = se_head_reference(xo, params)
    assert out_o.shape == (50, num_classes), out_o.shape
    assert jnp.allclose(out_o, ref_o, atol=5e-2, rtol=5e-2), (
        f"padded-batch max abs err = {jnp.max(jnp.abs(out_o - ref_o))}")

    print("KERNEL_OK")
</pallas_src>

<mosaic_0001>
module attributes {stable_mosaic.version = 11 : i64} {
  func.func @se_head_kernel(%arg0: i32, %arg1: memref<8x32xf32, #tpu.memory_space<vmem>>, %arg2: memref<32x8xf32, #tpu.memory_space<vmem>>, %arg3: memref<1x8xf32, #tpu.memory_space<vmem>>, %arg4: memref<8x32xf32, #tpu.memory_space<vmem>>, %arg5: memref<1x32xf32, #tpu.memory_space<vmem>>, %arg6: memref<32x128xf32, #tpu.memory_space<vmem>>, %arg7: memref<1x128xf32, #tpu.memory_space<vmem>>, %arg8: memref<128x64xf32, #tpu.memory_space<vmem>>, %arg9: memref<1x64xf32, #tpu.memory_space<vmem>>, %arg10: memref<64x8xf32, #tpu.memory_space<vmem>>, %arg11: memref<1x8xf32, #tpu.memory_space<vmem>>, %arg12: memref<8x8xf32, #tpu.memory_space<vmem>>) attributes {dimension_semantics = [#tpu.dimension_semantics<parallel>], iteration_bounds = array<i64: 1>, scalar_prefetch = 0 : i64, scratch_operands = 0 : i64, tpu.core_type = #tpu.core_type<tc>, window_params = [{transform_indices = @transform_0, window_bounds = array<i64: 8, 32>}, {pipeline_mode = #tpu.pipeline_mode<synchronous>, transform_indices = @transform_1, window_bounds = array<i64: 32, 8>}, {pipeline_mode = #tpu.pipeline_mode<synchronous>, transform_indices = @transform_2, window_bounds = array<i64: 1, 8>}, {pipeline_mode = #tpu.pipeline_mode<synchronous>, transform_indices = @transform_3, window_bounds = array<i64: 8, 32>}, {pipeline_mode = #tpu.pipeline_mode<synchronous>, transform_indices = @transform_4, window_bounds = array<i64: 1, 32>}, {pipeline_mode = #tpu.pipeline_mode<synchronous>, transform_indices = @transform_5, window_bounds = array<i64: 32, 128>}, {pipeline_mode = #tpu.pipeline_mode<synchronous>, transform_indices = @transform_6, window_bounds = array<i64: 1, 128>}, {pipeline_mode = #tpu.pipeline_mode<synchronous>, transform_indices = @transform_7, window_bounds = array<i64: 128, 64>}, {pipeline_mode = #tpu.pipeline_mode<synchronous>, transform_indices = @transform_8, window_bounds = array<i64: 1, 64>}, {pipeline_mode = #tpu.pipeline_mode<synchronous>, transform_indices = @transform_9, window_bounds = array<i64: 64, 8>}, {pipeline_mode = #tpu.pipeline_mode<synchronous>, transform_indices = @transform_10, window_bounds = array<i64: 1, 8>}, {transform_indices = @transform_11, window_bounds = array<i64: 8, 8>}]} {
    %c0 = arith.constant 0 : index
    %c0_0 = arith.constant 0 : index
    %0 = vector.load %arg1[%c0, %c0_0] : memref<8x32xf32, #tpu.memory_space<vmem>>, vector<8x32xf32>
    %c0_1 = arith.constant 0 : index
    %c0_2 = arith.constant 0 : index
    %1 = vector.load %arg2[%c0_1, %c0_2] : memref<32x8xf32, #tpu.memory_space<vmem>>, vector<32x8xf32>
    %cst = arith.constant dense<0.000000e+00> : vector<8x8xf32>
    %2 = tpu.matmul %0, %1, %cst {dimension_numbers = #tpu.dot_dimension_numbers<[1], [0], [0], [1], [0, 0, 1, 1], [], []>} : vector<8x32xf32>, vector<32x8xf32>, vector<8x8xf32> -> vector<8x8xf32>
    %c0_3 = arith.constant 0 : index
    %c0_4 = arith.constant 0 : index
    %3 = vector.load %arg3[%c0_3, %c0_4] : memref<1x8xf32, #tpu.memory_space<vmem>>, vector<1x8xf32>
    %4 = vector.broadcast %3 : vector<1x8xf32> to vector<8x8xf32>
    %5 = arith.addf %2, %4 : vector<8x8xf32>
    %cst_5 = arith.constant 0.000000e+00 : f32
    %6 = vector.broadcast %cst_5 : f32 to vector<8x8xf32>
    %7 = arith.maximumf %5, %6 : vector<8x8xf32>
    %c0_6 = arith.constant 0 : index
    %c0_7 = arith.constant 0 : index
    %8 = vector.load %arg4[%c0_6, %c0_7] : memref<8x32xf32, #tpu.memory_space<vmem>>, vector<8x32xf32>
    %cst_8 = arith.constant dense<0.000000e+00> : vector<8x32xf32>
    %9 = tpu.matmul %7, %8, %cst_8 {dimension_numbers = #tpu.dot_dimension_numbers<[1], [0], [0], [1], [0, 0, 1, 1], [], []>} : vector<8x8xf32>, vector<8x32xf32>, vector<8x32xf32> -> vector<8x32xf32>
    %c0_9 = arith.constant 0 : index
    %c0_10 = arith.constant 0 : index
    %10 = vector.load %arg5[%c0_9, %c0_10] : memref<1x32xf32, #tpu.memory_space<vmem>>, vector<1x32xf32>
    %11 = vector.broadcast %10 : vector<1x32xf32> to vector<8x32xf32>
    %12 = arith.addf %9, %11 : vector<8x32xf32>
    %13 = arith.negf %12 : vector<8x32xf32>
    %14 = math.exp %13 : vector<8x32xf32>
    %cst_11 = arith.constant 1.000000e+00 : f32
    %15 = vector.broadcast %cst_11 : f32 to vector<8x32xf32>
    %16 = arith.addf %15, %14 : vector<8x32xf32>
    %17 = arith.divf %15, %16 : vector<8x32xf32>
    %18 = arith.mulf %0, %17 : vector<8x32xf32>
    %c0_12 = arith.constant 0 : index
    %c0_13 = arith.constant 0 : index
    %19 = vector.load %arg6[%c0_12, %c0_13] : memref<32x128xf32, #tpu.memory_space<vmem>>, vector<32x128xf32>
    %cst_14 = arith.constant dense<0.000000e+00> : vector<8x128xf32>
    %20 = tpu.matmul %18, %19, %cst_14 {dimension_numbers = #tpu.dot_dimension_numbers<[1], [0], [0], [1], [0, 0, 1, 1], [], []>} : vector<8x32xf32>, vector<32x128xf32>, vector<8x128xf32> -> vector<8x128xf32>
    %c0_15 = arith.constant 0 : index
    %c0_16 = arith.constant 0 : index
    %21 = vector.load %arg7[%c0_15, %c0_16] : memref<1x128xf32, #tpu.memory_space<vmem>>, vector<1x128xf32>
    %22 = vector.broadcast %21 : vector<1x128xf32> to vector<8x128xf32>
    %23 = arith.addf %20, %22 : vector<8x128xf32>
    %cst_17 = arith.constant 5.000000e-01 : f32
    %24 = vector.broadcast %cst_17 : f32 to vector<8x128xf32>
    %25 = arith.mulf %24, %23 : vector<8x128xf32>
    %26 = arith.mulf %23, %23 : vector<8x128xf32>
    %27 = arith.mulf %26, %23 : vector<8x128xf32>
    %cst_18 = arith.constant 4.471500e-02 : f32
    %28 = vector.broadcast %cst_18 : f32 to vector<8x128xf32>
    %29 = arith.mulf %28, %27 : vector<8x128xf32>
    %30 = arith.addf %23, %29 : vector<8x128xf32>
    %cst_19 = arith.constant 0.797884583 : f32
    %31 = vector.broadcast %cst_19 : f32 to vector<8x128xf32>
    %32 = arith.mulf %31, %30 : vector<8x128xf32>
    %33 = math.tanh %32 : vector<8x128xf32>
    %cst_20 = arith.constant 1.000000e+00 : f32
    %34 = vector.broadcast %cst_20 : f32 to vector<8x128xf32>
    %35 = arith.addf %34, %33 : vector<8x128xf32>
    %36 = arith.mulf %25, %35 : vector<8x128xf32>
    %c0_21 = arith.constant 0 : index
    %c0_22 = arith.constant 0 : index
    %37 = vector.load %arg8[%c0_21, %c0_22] : memref<128x64xf32, #tpu.memory_space<vmem>>, vector<128x64xf32>
    %cst_23 = arith.constant dense<0.000000e+00> : vector<8x64xf32>
    %38 = tpu.matmul %36, %37, %cst_23 {dimension_numbers = #tpu.dot_dimension_numbers<[1], [0], [0], [1], [0, 0, 1, 1], [], []>} : vector<8x128xf32>, vector<128x64xf32>, vector<8x64xf32> -> vector<8x64xf32>
    %c0_24 = arith.constant 0 : index
    %c0_25 = arith.constant 0 : index
    %39 = vector.load %arg9[%c0_24, %c0_25] : memref<1x64xf32, #tpu.memory_space<vmem>>, vector<1x64xf32>
    %40 = vector.broadcast %39 : vector<1x64xf32> to vector<8x64xf32>
    %41 = arith.addf %38, %40 : vector<8x64xf32>
    %cst_26 = arith.constant 5.000000e-01 : f32
    %42 = vector.broadcast %cst_26 : f32 to vector<8x64xf32>
    %43 = arith.mulf %42, %41 : vector<8x64xf32>
    %44 = arith.mulf %41, %41 : vector<8x64xf32>
    %45 = arith.mulf %44, %41 : vector<8x64xf32>
    %cst_27 = arith.constant 4.471500e-02 : f32
    %46 = vector.broadcast %cst_27 : f32 to vector<8x64xf32>
    %47 = arith.mulf %46, %45 : vector<8x64xf32>
    %48 = arith.addf %41, %47 : vector<8x64xf32>
    %cst_28 = arith.constant 0.797884583 : f32
    %49 = vector.broadcast %cst_28 : f32 to vector<8x64xf32>
    %50 = arith.mulf %49, %48 : vector<8x64xf32>
    %51 = math.tanh %50 : vector<8x64xf32>
    %cst_29 = arith.constant 1.000000e+00 : f32
    %52 = vector.broadcast %cst_29 : f32 to vector<8x64xf32>
    %53 = arith.addf %52, %51 : vector<8x64xf32>
    %54 = arith.mulf %43, %53 : vector<8x64xf32>
    %c0_30 = arith.constant 0 : index
    %c0_31 = arith.constant 0 : index
    %55 = vector.load %arg10[%c0_30, %c0_31] : memref<64x8xf32, #tpu.memory_space<vmem>>, vector<64x8xf32>
    %cst_32 = arith.constant dense<0.000000e+00> : vector<8x8xf32>
    %56 = tpu.matmul %54, %55, %cst_32 {dimension_numbers = #tpu.dot_dimension_numbers<[1], [0], [0], [1], [0, 0, 1, 1], [], []>} : vector<8x64xf32>, vector<64x8xf32>, vector<8x8xf32> -> vector<8x8xf32>
    %c0_33 = arith.constant 0 : index
    %c0_34 = arith.constant 0 : index
    %57 = vector.load %arg11[%c0_33, %c0_34] : memref<1x8xf32, #tpu.memory_space<vmem>>, vector<1x8xf32>
    %58 = vector.broadcast %57 : vector<1x8xf32> to vector<8x8xf32>
    %59 = arith.addf %56, %58 : vector<8x8xf32>
    %c0_35 = arith.constant 0 : index
    %c0_36 = arith.constant 0 : index
    %60 = vector.load %arg12[%c0_35, %c0_36] : memref<8x8xf32, #tpu.memory_space<vmem>>, vector<8x8xf32>
    tpu.vector_store %arg12[%c0_35, %c0_36], %59 {strides = array<i32>} : memref<8x8xf32, #tpu.memory_space<vmem>>, vector<8x8xf32>,
    return
  }
  func.func @transform_0(%arg0: i32) -> (i32, i32) {
    %c0_i32 = arith.constant 0 : i32
    %c0_i32_0 = arith.constant 0 : i32
    return %arg0, %c0_i32 : i32, i32
  }
  func.func @transform_1(%arg0: i32) -> (i32, i32) {
    %c0_i32 = arith.constant 0 : i32
    %c0_i32_0 = arith.constant 0 : i32
    %c0_i32_1 = arith.constant 0 : i32
    return %c0_i32, %c0_i32_0 : i32, i32
  }
  func.func @transform_2(%arg0: i32) -> (i32, i32) {
    %c0_i32 = arith.constant 0 : i32
    %c0_i32_0 = arith.constant 0 : i32
    %c0_i32_1 = arith.constant 0 : i32
    return %c0_i32, %c0_i32_0 : i32, i32
  }
  func.func @transform_3(%arg0: i32) -> (i32, i32) {
    %c0_i32 = arith.constant 0 : i32
    %c0_i32_0 = arith.constant 0 : i32
    %c0_i32_1 = arith.constant 0 : i32
    return %c0_i32, %c0_i32_0 : i32, i32
  }
  func.func @transform_4(%arg0: i32) -> (i32, i32) {
    %c0_i32 = arith.constant 0 : i32
    %c0_i32_0 = arith.constant 0 : i32
    %c0_i32_1 = arith.constant 0 : i32
    return %c0_i32, %c0_i32_0 : i32, i32
  }
  func.func @transform_5(%arg0: i32) -> (i32, i32) {
    %c0_i32 = arith.constant 0 : i32
    %c0_i32_0 = arith.constant 0 : i32
    %c0_i32_1 = arith.constant 0 : i32
    return %c0_i32, %c0_i32_0 : i32, i32
  }
  func.func @transform_6(%arg0: i32) -> (i32, i32) {
    %c0_i32 = arith.constant 0 : i32
    %c0_i32_0 = arith.constant 0 : i32
    %c0_i32_1 = arith.constant 0 : i32
    return %c0_i32, %c0_i32_0 : i32, i32
  }
  func.func @transform_7(%arg0: i32) -> (i32, i32) {
    %c0_i32 = arith.constant 0 : i32
    %c0_i32_0 = arith.constant 0 : i32
    %c0_i32_1 = arith.constant 0 : i32
    return %c0_i32, %c0_i32_0 : i32, i32
  }
  func.func @transform_8(%arg0: i32) -> (i32, i32) {
    %c0_i32 = arith.constant 0 : i32
    %c0_i32_0 = arith.constant 0 : i32
    %c0_i32_1 = arith.constant 0 : i32
    return %c0_i32, %c0_i32_0 : i32, i32
  }
  func.func @transform_9(%arg0: i32) -> (i32, i32) {
    %c0_i32 = arith.constant 0 : i32
    %c0_i32_0 = arith.constant 0 : i32
    %c0_i32_1 = arith.constant 0 : i32
    return %c0_i32, %c0_i32_0 : i32, i32
  }
  func.func @transform_10(%arg0: i32) -> (i32, i32) {
    %c0_i32 = arith.constant 0 : i32
    %c0_i32_0 = arith.constant 0 : i32
    %c0_i32_1 = arith.constant 0 : i32
    return %c0_i32, %c0_i32_0 : i32, i32
  }
  func.func @transform_11(%arg0: i32) -> (i32, i32) {
    %c0_i32 = arith.constant 0 : i32
    %c0_i32_0 = arith.constant 0 : i32
    return %arg0, %c0_i32 : i32, i32
  }
}

</mosaic_0001>

<llo_original>
// kernel: tpu_custom_call.1
$region0: #{tpu_custom_call.1}
  #allocation0 [shape = 'u32[]', space=smem, size = 0x4, offset = 0x4, fixed_abs, tag = 'smem constant byte address 0x4 - core index']
  #allocation1 [shape = 'u32[144,128]{1,0:T(1,128)}', space=vmem, size = 0x12000, scoped, tag = 'internal scratch']
  %s0 = inlined_call_operand.vmem [shape: f32[8,32], index: 0, kind: input, shape index: {}]
  %s1 = inlined_call_operand.vmem [shape: f32[32,8], index: 1, kind: input, shape index: {}]
  %s2 = inlined_call_operand.vmem [shape: f32[1,8], index: 2, kind: input, shape index: {}]
  %s3 = inlined_call_operand.vmem [shape: f32[8,32], index: 3, kind: input, shape index: {}]
  %s4 = inlined_call_operand.vmem [shape: f32[1,32], index: 4, kind: input, shape index: {}]
  %s5 = inlined_call_operand.vmem [shape: f32[32,128], index: 5, kind: input, shape index: {}]
  %s6 = inlined_call_operand.vmem [shape: f32[1,128], index: 6, kind: input, shape index: {}]
  %s7 = inlined_call_operand.vmem [shape: f32[128,64], index: 7, kind: input, shape index: {}]
  %s8 = inlined_call_operand.vmem [shape: f32[1,64], index: 8, kind: input, shape index: {}]
  %s9 = inlined_call_operand.vmem [shape: f32[64,8], index: 9, kind: input, shape index: {}]
  %s10 = inlined_call_operand.vmem [shape: f32[1,8], index: 10, kind: input, shape index: {}]
  %s11 = inlined_call_operand.hbm [shape: f32[8,8], index: 11, kind: output, shape index: {}]
  %s12 = sld [smem:[#allocation0]]
  $region54: #{tpu_custom_call.1} parent=0
    _
  %s14 = ssub.s32 1, %s12
  %s15 = scalar_select 0, %s14, %s12
  $region1: #{tpu_custom_call.1} parent=0
    #allocation2 [shape = 'u8[4096]{0}', space=vmem, size = 0x1000, scoped, tag = 'output window, operand 0, single buffered']
    #allocation3 [shape = 's32[1]{0}', space=sflag, size = 0x4, scoped, tag = 'scoped memory for tpu_custom_call.1']
    %16 = vsyncpa [#allocation3], 0
    // Predicated region
    $region2: #{tpu_custom_call.1} parent=1 // pred_check
      _
    $region3: #{tpu_custom_call.1} parent=1 // pred_check_branch
      %18 = sbr.rel (0) target = $region5
    $region4: #{tpu_custom_call.1} parent=1 // pred_region
      _
    $region5: #{tpu_custom_call.1} parent=1 // pred_fallthru
      _
    // Predicated region
    $region6: #{tpu_custom_call.1} parent=1 // pred_check
      _
    $region7: #{tpu_custom_call.1} parent=1 // pred_check_branch
      %20 = sbr.rel (0) target = $region9
    $region8: #{tpu_custom_call.1} parent=1 // pred_region
      _
    $region9: #{tpu_custom_call.1} parent=1 // pred_fallthru
      _
    // Predicated region
    $region10: #{tpu_custom_call.1} parent=1 // pred_check
      _
    $region11: #{tpu_custom_call.1} parent=1 // pred_check_branch
      %22 = sbr.rel (0) target = $region13
    $region12: #{tpu_custom_call.1} parent=1 // pred_region
      _
    $region13: #{tpu_custom_call.1} parent=1 // pred_fallthru
      _
    // Predicated region
    $region14: #{tpu_custom_call.1} parent=1 // pred_check
      _
    $region15: #{tpu_custom_call.1} parent=1 // pred_check_branch
      %24 = sbr.rel (0) target = $region17
    $region16: #{tpu_custom_call.1} parent=1 // pred_region
      _
    $region17: #{tpu_custom_call.1} parent=1 // pred_fallthru
      _
    // Predicated region
    $region18: #{tpu_custom_call.1} parent=1 // pred_check
      _
    $region19: #{tpu_custom_call.1} parent=1 // pred_check_branch
      %26 = sbr.rel (0) target = $region21
    $region20: #{tpu_custom_call.1} parent=1 // pred_region
      _
    $region21: #{tpu_custom_call.1} parent=1 // pred_fallthru
      _
    // Predicated region
    $region22: #{tpu_custom_call.1} parent=1 // pred_check
      _
    $region23: #{tpu_custom_call.1} parent=1 // pred_check_branch
      %28 = sbr.rel (0) target = $region25
    $region24: #{tpu_custom_call.1} parent=1 // pred_region
      _
    $region25: #{tpu_custom_call.1} parent=1 // pred_fallthru
      _
    // Predicated region
    $region26: #{tpu_custom_call.1} parent=1 // pred_check
      _
    $region27: #{tpu_custom_call.1} parent=1 // pred_check_branch
      %30 = sbr.rel (0) target = $region29
    $region28: #{tpu_custom_call.1} parent=1 // pred_region
      _
    $region29: #{tpu_custom_call.1} parent=1 // pred_fallthru
      _
    // Predicated region
    $region30: #{tpu_custom_call.1} parent=1 // pred_check
      _
    $region31: #{tpu_custom_call.1} parent=1 // pred_check_branch
      %32 = sbr.rel (0) target = $region33
    $region32: #{tpu_custom_call.1} parent=1 // pred_region
      _
    $region33: #{tpu_custom_call.1} parent=1 // pred_fallthru
      _
    // Predicated region
    $region34: #{tpu_custom_call.1} parent=1 // pred_check
      _
    $region35: #{tpu_custom_call.1} parent=1 // pred_check_branch
      %34 = sbr.rel (0) target = $region37
    $region36: #{tpu_custom_call.1} parent=1 // pred_region
      _
    $region37: #{tpu_custom_call.1} parent=1 // pred_fallthru
      _
    // Predicated region
    $region38: #{tpu_custom_call.1} parent=1 // pred_check
      _
    $region39: #{tpu_custom_call.1} parent=1 // pred_check_branch
      %36 = sbr.rel (0) target = $region41
    $region40: #{tpu_custom_call.1} parent=1 // pred_region
      _
    $region41: #{tpu_custom_call.1} parent=1 // pred_fallthru
      _
    // Predicated region
    $region42: #{tpu_custom_call.1} parent=1 // pred_check
      _
    $region43: #{tpu_custom_call.1} parent=1 // pred_check_branch
      %38 = sbr.rel (0) target = $region45
    $region44: #{tpu_custom_call.1} parent=1 // pred_region
      _
    $region45: #{tpu_custom_call.1} parent=1 // pred_fallthru
      _
    %v39 = vld [vmem:[%s0] sm:$0xff]
    %v40 = vld [vmem:[%s1] sm:$0xff]
    %v41 = vld [vmem:[%s1 + $0x8] sm:$0xff]
    %v42 = vld [vmem:[%s1 + $0x10] sm:$0xff]
    %v43 = vld [vmem:[%s1 + $0x18] sm:$0xff]
    %v44 = vld [vmem:[%s2] sm:$0x1]
    %v46 = vlaneseq
    %v47 = vshrl.u32 %v46, 7
    %v48 = vsub.s32 0, %v47
    %v49 = vrot.slane %v44, %v48
    %vm51 = vcmask 261120
    %v53 = vsel %vm51, %v39, 0
    %55 = vmatprep.subr.mxu0 0.0
    %56 = vmatpush1.msra.mxu0 %v40
    %57 = vmatprep.subr.mxu0 0.0
    %58 = vmatpush1.msra.mxu0 %v41
    %59 = vmatprep.subr.mxu0 0.0
    %60 = vmatpush1.msra.mxu0 %v42
    %61 = vmatprep.subr.mxu0 0.0
    %62 = vmatpush1.msra.mxu0 %v43
    %63 = vmatprep.subr.mxu0 0.0
    %64 = vmatpush1.msra.mxu0 0.0
    %65 = vmatprep.subr.mxu0 0.0
    %66 = vmatpush1.msra.mxu0 0.0
    %67 = vmatprep.subr.mxu0 0.0
    %68 = vmatpush1.msra.mxu0 0.0
    %69 = vmatprep.subr.mxu0 0.0
    %70 = vmatpush1.msra.mxu0 0.0
    %71 = vmatprep.subr.mxu0 0.0
    %72 = vmatpush1.msra.mxu0 0.0
    %73 = vmatprep.subr.mxu0 0.0
    %74 = vmatpush1.msra.mxu0 0.0
    %75 = vmatprep.subr.mxu0 0.0
    %76 = vmatpush1.msra.mxu0 0.0
    %77 = vmatprep.subr.mxu0 0.0
    %78 = vmatpush1.msra.mxu0 0.0
    %79 = vmatprep.subr.mxu0 0.0
    %80 = vmatpush1.msra.mxu0 0.0
    %81 = vmatprep.subr.mxu0 0.0
    %82 = vmatpush1.msra.mxu0 0.0
    %83 = vmatprep.subr.mxu0 0.0
    %84 = vmatpush1.msra.mxu0 0.0
    %85 = vmatprep.subr.mxu0 0.0
    %86 = vmatpush1.msra.mxu0 0.0
    %87 = vmatprep.subr.mxu0 0.0
    %88 = vmatpush1.msra.mxu0 0.0
    %89 = vmatprep.subr.mxu0 0.0
    %90 = vmatpush1.msra.mxu0 0.0
    %91 = vmatprep.subr.mxu0 0.0
    %92 = vmatpush1.msra.mxu0 0.0
    %93 = vmatprep.subr.mxu0 0.0
    %94 = vmatpush1.msra.mxu0 0.0
    %95 = vmatprep.subr.mxu0 0.0
    %96 = vmatpush1.msra.mxu0 0.0
    %97 = vmatprep.subr.mxu0 0.0
    %98 = vmatpush1.msra.mxu0 0.0
    %99 = vmatprep.subr.mxu0 0.0
    %100 = vmatpush1.msra.mxu0 0.0
    %101 = vmatprep.subr.mxu0 0.0
    %102 = vmatpush1.msra.mxu0 0.0
    %103 = vmatprep.subr.mxu0 0.0
    %104 = vmatpush1.msra.mxu0 0.0
    %105 = vmatprep.subr.mxu0 0.0
    %106 = vmatpush1.msra.mxu0 0.0
    %107 = vmatprep.subr.mxu0 0.0
    %108 = vmatpush1.msra.mxu0 0.0
    %109 = vmatprep.subr.mxu0 0.0
    %110 = vmatpush1.msra.mxu0 0.0
    %111 = vmatprep.subr.mxu0 0.0
    %112 = vmatpush1.msra.mxu0 0.0
    %113 = vmatprep.subr.mxu0 0.0
    %114 = vmatpush1.msra.mxu0 0.0
    %115 = vmatprep.subr.mxu0 0.0
    %116 = vmatpush1.msra.mxu0 0.0
    %117 = vmatprep.subr.mxu0 0.0
    %118 = vmatpush1.msra.mxu0 0.0
    %119 = vmatprep.mubr.f32.mxu0 0.0
    %120 = vmatmul.mubr.f32.gmra.mrb[0].mxu0 %v53
    %v121 = vpop.f32.mrb[0].mxu0
    %v122 = vadd.f32 %v49, %v121
    %v123 = vpop.f32.mrb[0].mxu0
    %124 = vdwg.mxu0
    %v125 = vmax.f32 %v122, 0.0
    %v126 = vld [vmem:[%s3] sm:$0xff]
    %v127 = vld [vmem:[%s4] sm:$0x1]
    %v129 = vlaneseq
    %v130 = vshrl.u32 %v129, 7
    %v131 = vsub.s32 0, %v130
    %v132 = vrot.slane %v127, %v131
    %vm134 = vcmask 64512
    %v136 = vsel %vm134, %v125, 0
    %138 = vmatprep.subr.mxu0 0.0
    %139 = vmatpush1.msra.mxu0 %v126
    %140 = vmatprep.subr.mxu0 0.0
    %141 = vmatpush1.msra.mxu0 0.0
    %142 = vmatprep.subr.mxu0 0.0
    %143 = vmatpush1.msra.mxu0 0.0
    %144 = vmatprep.subr.mxu0 0.0
    %145 = vmatpush1.msra.mxu0 0.0
    %146 = vmatprep.subr.mxu0 0.0
    %147 = vmatpush1.msra.mxu0 0.0
    %148 = vmatprep.subr.mxu0 0.0
    %149 = vmatpush1.msra.mxu0 0.0
    %150 = vmatprep.subr.mxu0 0.0
    %151 = vmatpush1.msra.mxu0 0.0
    %152 = vmatprep.subr.mxu0 0.0
    %153 = vmatpush1.msra.mxu0 0.0
    %154 = vmatprep.subr.mxu0 0.0
    %155 = vmatpush1.msra.mxu0 0.0
    %156 = vmatprep.subr.mxu0 0.0
    %157 = vmatpush1.msra.mxu0 0.0
    %158 = vmatprep.subr.mxu0 0.0
    %159 = vmatpush1.msra.mxu0 0.0
    %160 = vmatprep.subr.mxu0 0.0
    %161 = vmatpush1.msra.mxu0 0.0
    %162 = vmatprep.subr.mxu0 0.0
    %163 = vmatpush1.msra.mxu0 0.0
    %164 = vmatprep.subr.mxu0 0.0
    %165 = vmatpush1.msra.mxu0 0.0
    %166 = vmatprep.subr.mxu0 0.0
    %167 = vmatpush1.msra.mxu0 0.0
    %168 = vmatprep.subr.mxu0 0.0
    %169 = vmatpush1.msra.mxu0 0.0
    %170 = vmatprep.subr.mxu0 0.0
    %171 = vmatpush1.msra.mxu0 0.0
    %172 = vmatprep.subr.mxu0 0.0
    %173 = vmatpush1.msra.mxu0 0.0
    %174 = vmatprep.subr.mxu0 0.0
    %175 = vmatpush1.msra.mxu0 0.0
    %176 = vmatprep.subr.mxu0 0.0
    %177 = vmatpush1.msra.mxu0 0.0
    %178 = vmatprep.subr.mxu0 0.0
    %179 = vmatpush1.msra.mxu0 0.0
    %180 = vmatprep.subr.mxu0 0.0
    %181 = vmatpush1.msra.mxu0 0.0
    %182 = vmatprep.subr.mxu0 0.0
    %183 = vmatpush1.msra.mxu0 0.0
    %184 = vmatprep.subr.mxu0 0.0
    %185 = vmatpush1.msra.mxu0 0.0
    %186 = vmatprep.subr.mxu0 0.0
    %187 = vmatpush1.msra.mxu0 0.0
    %188 = vmatprep.subr.mxu0 0.0
    %189 = vmatpush1.msra.mxu0 0.0
    %190 = vmatprep.subr.mxu0 0.0
    %191 = vmatpush1.msra.mxu0 0.0
    %192 = vmatprep.subr.mxu0 0.0
    %193 = vmatpush1.msra.mxu0 0.0
    %194 = vmatprep.subr.mxu0 0.0
    %195 = vmatpush1.msra.mxu0 0.0
    %196 = vmatprep.subr.mxu0 0.0
    %197 = vmatpush1.msra.mxu0 0.0
    %198 = vmatprep.subr.mxu0 0.0
    %199 = vmatpush1.msra.mxu0 0.0
    %200 = vmatprep.subr.mxu0 0.0
    %201 = vmatpush1.msra.mxu0 0.0
    %202 = vmatprep.mubr.f32.mxu0 0.0
    %203 = vmatmul.mubr.f32.gmra.mrb[0].mxu0 %v136
    %v204 = vpop.f32.mrb[0].mxu0
    %v205 = vadd.f32 %v132, %v204
    %v206 = vpop.f32.mrb[0].mxu0
    %207 = vdwg.mxu0
    %v208 = vxor.u32 %v205, 2147483648
    %v209 = vmul.f32 %v208, 1.442695
    %v210 = vpow.pop %v209
    %v211 = vadd.f32 %v210, 1.0
    %v212 = vrcp.pop %v211
    %v213 = vmul.f32 1.0, %v212
    %v214 = vmul.f32 %v39, %v213
    %v215 = vld [vmem:[%s5] sm:$0xff]
    %v216 = vld [vmem:[%s5 + $0x8] sm:$0xff]
    %v217 = vld [vmem:[%s5 + $0x10] sm:$0xff]
    %v218 = vld [vmem:[%s5 + $0x18] sm:$0xff]
    %v219 = vld [vmem:[%s6] sm:$0x1]
    %v221 = vlaneseq
    %v222 = vshrl.u32 %v221, 7
    %v223 = vsub.s32 0, %v222
    %v224 = vrot.slane %v219, %v223
    %v227 = vsel %vm51, %v214, 0
    %229 = vmatprep.subr.mxu0 0.0
    %230 = vmatpush1.msra.mxu0 %v215
    %231 = vmatprep.subr.mxu0 0.0
    %232 = vmatpush1.msra.mxu0 %v216
    %233 = vmatprep.subr.mxu0 0.0
    %234 = vmatpush1.msra.mxu0 %v217
    %235 = vmatprep.subr.mxu0 0.0
    %236 = vmatpush1.msra.mxu0 %v218
    %237 = vmatprep.subr.mxu0 0.0
    %238 = vmatpush1.msra.mxu0 0.0
    %239 = vmatprep.subr.mxu0 0.0
    %240 = vmatpush1.msra.mxu0 0.0
    %241 = vmatprep.subr.mxu0 0.0
    %242 = vmatpush1.msra.mxu0 0.0
    %243 = vmatprep.subr.mxu0 0.0
    %244 = vmatpush1.msra.mxu0 0.0
    %245 = vmatprep.subr.mxu0 0.0
    %246 = vmatpush1.msra.mxu0 0.0
    %247 = vmatprep.subr.mxu0 0.0
    %248 = vmatpush1.msra.mxu0 0.0
    %249 = vmatprep.subr.mxu0 0.0
    %250 = vmatpush1.msra.mxu0 0.0
    %251 = vmatprep.subr.mxu0 0.0
    %252 = vmatpush1.msra.mxu0 0.0
    %253 = vmatprep.subr.mxu0 0.0
    %254 = vmatpush1.msra.mxu0 0.0
    %255 = vmatprep.subr.mxu0 0.0
    %256 = vmatpush1.msra.mxu0 0.0
    %257 = vmatprep.subr.mxu0 0.0
    %258 = vmatpush1.msra.mxu0 0.0
    %259 = vmatprep.subr.mxu0 0.0
    %260 = vmatpush1.msra.mxu0 0.0
    %261 = vmatprep.subr.mxu0 0.0
    %262 = vmatpush1.msra.mxu0 0.0
    %263 = vmatprep.subr.mxu0 0.0
    %264 = vmatpush1.msra.mxu0 0.0
    %265 = vmatprep.subr.mxu0 0.0
    %266 = vmatpush1.msra.mxu0 0.0
    %267 = vmatprep.subr.mxu0 0.0
    %268 = vmatpush1.msra.mxu0 0.0
    %269 = vmatprep.subr.mxu0 0.0
    %270 = vmatpush1.msra.mxu0 0.0
    %271 = vmatprep.subr.mxu0 0.0
    %272 = vmatpush1.msra.mxu0 0.0
    %273 = vmatprep.subr.mxu0 0.0
    %274 = vmatpush1.msra.mxu0 0.0
    %275 = vmatprep.subr.mxu0 0.0
    %276 = vmatpush1.msra.mxu0 0.0
    %277 = vmatprep.subr.mxu0 0.0
    %278 = vmatpush1.msra.mxu0 0.0
    %279 = vmatprep.subr.mxu0 0.0
    %280 = vmatpush1.msra.mxu0 0.0
    %281 = vmatprep.subr.mxu0 0.0
    %282 = vmatpush1.msra.mxu0 0.0
    %283 = vmatprep.subr.mxu0 0.0
    %284 = vmatpush1.msra.mxu0 0.0
    %285 = vmatprep.subr.mxu0 0.0
    %286 = vmatpush1.msra.mxu0 0.0
    %287 = vmatprep.subr.mxu0 0.0
    %288 = vmatpush1.msra.mxu0 0.0
    %289 = vmatprep.subr.mxu0 0.0
    %290 = vmatpush1.msra.mxu0 0.0
    %291 = vmatprep.subr.mxu0 0.0
    %292 = vmatpush1.msra.mxu0 0.0
    %293 = vmatprep.mubr.f32.mxu0 0.0
    %294 = vmatmul.mubr.f32.gmra.mrb[0].mxu0 %v227
    %v295 = vpop.f32.mrb[0].mxu0
    %v296 = vadd.f32 %v224, %v295
    %v297 = vpop.f32.mrb[0].mxu0
    %298 = vdwg.mxu0
    %v299 = vmul.f32 %v296, 0.5
    %v300 = vmul.f32 %v296, %v296
    %v301 = vmul.f32 %v300, %v296
    %v302 = vmul.f32 %v301, 0.044715
    %v303 = vadd.f32 %v296, %v302
    %v304 = vmul.f32 %v303, 0.7978846
    %v305 = vtanh.pop %v304
    %v306 = vadd.f32 %v305, 1.0
    %v307 = vmul.f32 %v299, %v306
    %v308 = vld [vmem:[%s7] sm:$0xff]
    %v309 = vld [vmem:[%s7 + $0x8] sm:$0xff]
    %v310 = vld [vmem:[%s7 + $0x10] sm:$0xff]
    %v311 = vld [vmem:[%s7 + $0x18] sm:$0xff]
    %v312 = vld [vmem:[%s7 + $0x20] sm:$0xff]
    %v313 = vld [vmem:[%s7 + $0x28] sm:$0xff]
    %v314 = vld [vmem:[%s7 + $0x30] sm:$0xff]
    %v315 = vld [vmem:[%s7 + $0x38] sm:$0xff]
    %v316 = vld [vmem:[%s7 + $0x40] sm:$0xff]
    %v317 = vld [vmem:[%s7 + $0x48] sm:$0xff]
    %v318 = vld [vmem:[%s7 + $0x50] sm:$0xff]
    %v319 = vld [vmem:[%s7 + $0x58] sm:$0xff]
    %v320 = vld [vmem:[%s7 + $0x60] sm:$0xff]
    %v321 = vld [vmem:[%s7 + $0x68] sm:$0xff]
    %v322 = vld [vmem:[%s7 + $0x70] sm:$0xff]
    %v323 = vld [vmem:[%s7 + $0x78] sm:$0xff]
    %v324 = vld [vmem:[%s8] sm:$0x1]
    %v326 = vlaneseq
    %v327 = vshrl.u32 %v326, 7
    %v328 = vsub.s32 0, %v327
    %v329 = vrot.slane %v324, %v328
    %331 = vmatprep.subr.mxu0 0.0
    %332 = vmatpush1.msra.mxu0 %v308
    %333 = vmatprep.subr.mxu0 0.0
    %334 = vmatpush1.msra.mxu0 %v309
    %335 = vmatprep.subr.mxu0 0.0
    %336 = vmatpush1.msra.mxu0 %v310
    %337 = vmatprep.subr.mxu0 0.0
    %338 = vmatpush1.msra.mxu0 %v311
    %339 = vmatprep.subr.mxu0 0.0
    %340 = vmatpush1.msra.mxu0 %v312
    %341 = vmatprep.subr.mxu0 0.0
    %342 = vmatpush1.msra.mxu0 %v313
    %343 = vmatprep.subr.mxu0 0.0
    %344 = vmatpush1.msra.mxu0 %v314
    %345 = vmatprep.subr.mxu0 0.0
    %346 = vmatpush1.msra.mxu0 %v315
    %347 = vmatprep.subr.mxu0 0.0
    %348 = vmatpush1.msra.mxu0 %v316
    %349 = vmatprep.subr.mxu0 0.0
    %350 = vmatpush1.msra.mxu0 %v317
    %351 = vmatprep.subr.mxu0 0.0
    %352 = vmatpush1.msra.mxu0 %v318
    %353 = vmatprep.subr.mxu0 0.0
    %354 = vmatpush1.msra.mxu0 %v319
    %355 = vmatprep.subr.mxu0 0.0
    %356 = vmatpush1.msra.mxu0 %v320
    %357 = vmatprep.subr.mxu0 0.0
    %358 = vmatpush1.msra.mxu0 %v321
    %359 = vmatprep.subr.mxu0 0.0
    %360 = vmatpush1.msra.mxu0 %v322
    %361 = vmatprep.subr.mxu0 0.0
    %362 = vmatpush1.msra.mxu0 %v323
    %363 = vmatprep.subr.mxu0 0.0
    %364 = vmatpush1.msra.mxu0 0.0
    %365 = vmatprep.subr.mxu0 0.0
    %366 = vmatpush1.msra.mxu0 0.0
    %367 = vmatprep.subr.mxu0 0.0
    %368 = vmatpush1.msra.mxu0 0.0
    %369 = vmatprep.subr.mxu0 0.0
    %370 = vmatpush1.msra.mxu0 0.0
    %371 = vmatprep.subr.mxu0 0.0
    %372 = vmatpush1.msra.mxu0 0.0
    %373 = vmatprep.subr.mxu0 0.0
    %374 = vmatpush1.msra.mxu0 0.0
    %375 = vmatprep.subr.mxu0 0.0
    %376 = vmatpush1.msra.mxu0 0.0
    %377 = vmatprep.subr.mxu0 0.0
    %378 = vmatpush1.msra.mxu0 0.0
    %379 = vmatprep.subr.mxu0 0.0
    %380 = vmatpush1.msra.mxu0 0.0
    %381 = vmatprep.subr.mxu0 0.0
    %382 = vmatpush1.msra.mxu0 0.0
    %383 = vmatprep.subr.mxu0 0.0
    %384 = vmatpush1.msra.mxu0 0.0
    %385 = vmatprep.subr.mxu0 0.0
    %386 = vmatpush1.msra.mxu0 0.0
    %387 = vmatprep.subr.mxu0 0.0
    %388 = vmatpush1.msra.mxu0 0.0
    %389 = vmatprep.subr.mxu0 0.0
    %390 = vmatpush1.msra.mxu0 0.0
    %391 = vmatprep.subr.mxu0 0.0
    %392 = vmatpush1.msra.mxu0 0.0
    %393 = vmatprep.subr.mxu0 0.0
    %394 = vmatpush1.msra.mxu0 0.0
    %395 = vmatprep.mubr.f32.mxu0 0.0
    %396 = vmatmul.mubr.f32.gmra.mrb[0].mxu0 %v307
    %v397 = vpop.f32.mrb[0].mxu0
    %v398 = vadd.f32 %v329, %v397
    %v399 = vpop.f32.mrb[0].mxu0
    %400 = vdwg.mxu0
    %v401 = vmul.f32 %v398, 0.5
    %v402 = vmul.f32 %v398, %v398
    %v403 = vmul.f32 %v402, %v398
    %v404 = vmul.f32 %v403, 0.044715
    %v405 = vadd.f32 %v398, %v404
    %v406 = vmul.f32 %v405, 0.7978846
    %v407 = vtanh.pop %v406
    %v408 = vadd.f32 %v407, 1.0
    %v409 = vmul.f32 %v401, %v408
    %v410 = vld [vmem:[%s9] sm:$0xff]
    %v411 = vld [vmem:[%s9 + $0x8] sm:$0xff]
    %v412 = vld [vmem:[%s9 + $0x10] sm:$0xff]
    %v413 = vld [vmem:[%s9 + $0x18] sm:$0xff]
    %v414 = vld [vmem:[%s9 + $0x20] sm:$0xff]
    %v415 = vld [vmem:[%s9 + $0x28] sm:$0xff]
    %v416 = vld [vmem:[%s9 + $0x30] sm:$0xff]
    %v417 = vld [vmem:[%s9 + $0x38] sm:$0xff]
    %v418 = vld [vmem:[%s10] sm:$0x1]
    %v420 = vlaneseq
    %v421 = vshrl.u32 %v420, 7
    %v422 = vsub.s32 0, %v421
    %v423 = vrot.slane %v418, %v422
    %vm425 = vcmask 523264
    %v427 = vsel %vm425, %v409, 0
    %429 = vmatprep.subr.mxu0 0.0
    %430 = vmatpush1.msra.mxu0 %v410
    %431 = vmatprep.subr.mxu0 0.0
    %432 = vmatpush1.msra.mxu0 %v411
    %433 = vmatprep.subr.mxu0 0.0
    %434 = vmatpush1.msra.mxu0 %v412
    %435 = vmatprep.subr.mxu0 0.0
    %436 = vmatpush1.msra.mxu0 %v413
    %437 = vmatprep.subr.mxu0 0.0
    %438 = vmatpush1.msra.mxu0 %v414
    %439 = vmatprep.subr.mxu0 0.0
    %440 = vmatpush1.msra.mxu0 %v415
    %441 = vmatprep.subr.mxu0 0.0
    %442 = vmatpush1.msra.mxu0 %v416
    %443 = vmatprep.subr.mxu0 0.0
    %444 = vmatpush1.msra.mxu0 %v417
    %445 = vmatprep.subr.mxu0 0.0
    %446 = vmatpush1.msra.mxu0 0.0
    %447 = vmatprep.subr.mxu0 0.0
    %448 = vmatpush1.msra.mxu0 0.0
    %449 = vmatprep.subr.mxu0 0.0
    %450 = vmatpush1.msra.mxu0 0.0
    %451 = vmatprep.subr.mxu0 0.0
    %452 = vmatpush1.msra.mxu0 0.0
    %453 = vmatprep.subr.mxu0 0.0
    %454 = vmatpush1.msra.mxu0 0.0
    %455 = vmatprep.subr.mxu0 0.0
    %456 = vmatpush1.msra.mxu0 0.0
    %457 = vmatprep.subr.mxu0 0.0
    %458 = vmatpush1.msra.mxu0 0.0
    %459 = vmatprep.subr.mxu0 0.0
    %460 = vmatpush1.msra.mxu0 0.0
    %461 = vmatprep.subr.mxu0 0.0
    %462 = vmatpush1.msra.mxu0 0.0
    %463 = vmatprep.subr.mxu0 0.0
    %464 = vmatpush1.msra.mxu0 0.0
    %465 = vmatprep.subr.mxu0 0.0
    %466 = vmatpush1.msra.mxu0 0.0
    %467 = vmatprep.subr.mxu0 0.0
    %468 = vmatpush1.msra.mxu0 0.0
    %469 = vmatprep.subr.mxu0 0.0
    %470 = vmatpush1.msra.mxu0 0.0
    %471 = vmatprep.subr.mxu0 0.0
    %472 = vmatpush1.msra.mxu0 0.0
    %473 = vmatprep.subr.mxu0 0.0
    %474 = vmatpush1.msra.mxu0 0.0
    %475 = vmatprep.subr.mxu0 0.0
    %476 = vmatpush1.msra.mxu0 0.0
    %477 = vmatprep.subr.mxu0 0.0
    %478 = vmatpush1.msra.mxu0 0.0
    %479 = vmatprep.subr.mxu0 0.0
    %480 = vmatpush1.msra.mxu0 0.0
    %481 = vmatprep.subr.mxu0 0.0
    %482 = vmatpush1.msra.mxu0 0.0
    %483 = vmatprep.subr.mxu0 0.0
    %484 = vmatpush1.msra.mxu0 0.0
    %485 = vmatprep.subr.mxu0 0.0
    %486 = vmatpush1.msra.mxu0 0.0
    %487 = vmatprep.subr.mxu0 0.0
    %488 = vmatpush1.msra.mxu0 0.0
    %489 = vmatprep.subr.mxu0 0.0
    %490 = vmatpush1.msra.mxu0 0.0
    %491 = vmatprep.subr.mxu0 0.0
    %492 = vmatpush1.msra.mxu0 0.0
    %493 = vmatprep.mubr.f32.mxu0 0.0
    %494 = vmatmul.mubr.f32.gmra.mrb[0].mxu0 %v427
    %v495 = vpop.f32.mrb[0].mxu0
    %v496 = vadd.f32 %v423, %v495
    %v497 = vpop.f32.mrb[0].mxu0
    %498 = vdwg.mxu0
    %499 = vst.msk [vmem:[#allocation2] sm:$0xff] %vm134, %v496
    // Predicated region
    $region46: #{tpu_custom_call.1} parent=1 // pred_check
      _
    $region47: #{tpu_custom_call.1} parent=1 // pred_check_branch
      %501 = sbr.rel (0) target = $region49
    $region48: #{tpu_custom_call.1} parent=1 // pred_region
      %s503 = ssub.s32 128, 128
      %504 = vsyncadd [#allocation3], %s503
      %s506 = sshll.u32 [#allocation2], 4
      %s507 = int_to_ptr.vmem [resolvable:$true] %s506
      %509 = dma.vmem_to_hbm [thread:$0]  %s507, 128, %s11, [#allocation3]
    $region49: #{tpu_custom_call.1} parent=1 // pred_fallthru
      _
    // Predicated region
    $region50: #{tpu_custom_call.1} parent=1 // pred_check
      _
    $region51: #{tpu_custom_call.1} parent=1 // pred_check_branch
      %511 = sbr.rel (0) target = $region53
    $region52: #{tpu_custom_call.1} parent=1 // pred_region
      %512 = dma.done [#allocation3], 128
    $region53: #{tpu_custom_call.1} parent=1 // pred_fallthru
      _
    %513 = vsyncpa [#allocation3], 1

</llo_original>
